<compile_context>
chip_gen: v7x
topology: tpu7x:2x2x1
jax: 0.10.0
libtpu: 0.0.40
codegen_flags: <defaults>
</compile_context>

<pallas_src>
import numpy as np
import jax
import jax.numpy as jnp
from jax.experimental import pallas as pl
from jax.experimental.pallas import tpu as pltpu


def make_shuffle_ind(input_channel: int, groups: int = 4) -> np.ndarray:
    """Same index construction as shuffle_layer.__init__."""
    ind = np.arange(input_channel)
    ind = ind.reshape(groups, input_channel // groups).T
    return ind.reshape(input_channel).astype(np.int32)


def _divisors(n: int):
    return [d for d in range(1, n + 1) if n % d == 0]


# ---------------------------------------------------------------------------
# Fast path: pure copy, permutation done by the output BlockSpec index_map.
# ---------------------------------------------------------------------------
def _copy_kernel(x_ref, o_ref):
    # x_ref: (t_n, t_cg, t_hw)  ->  o_ref: (t_n, t_cg, t_hw).  Pure copy; the
    # channel shuffle is realized by where the output block lands.
    o_ref[...] = x_ref[...]


def _shuffle_fast(x: jax.Array, groups: int) -> jax.Array:
    N, C, H, W = x.shape
    g = groups
    cg = C // g
    HW = H * W
    itemsize = jnp.dtype(x.dtype).itemsize
    # Sublane packing quantum: 8 for 32-bit, 16 for bf16, 32 for int8.
    quantum = max(8, 32 // itemsize)

    TARGET = 4 * 1024 * 1024  # ~4 MiB blocks: long DMA bursts, few grid steps
    row_bytes = HW * itemsize

    # --- channel tile: keep full HW rows, split cg only when the slab is big.
    if cg * row_bytes <= TARGET:
        t_cg = cg
    else:
        cand = [d for d in _divisors(cg)
                if d % quantum == 0 and d * row_bytes <= TARGET]
        if cand:
            t_cg = max(cand)
        else:
            cand = [d for d in _divisors(cg) if d % quantum == 0]
            t_cg = min(cand) if cand else cg

    # --- last-resort spatial tile: only if a single (t_cg, HW) slab is still
    #     huge (keeps the block bounded under v7x's 64 MiB VMEM); any divisor
    #     that keeps t_hw % 128 == 0 is allowed.
    t_hw = HW
    if t_cg * HW * itemsize > 2 * TARGET:
        cand = [d for d in _divisors(HW)
                if d % 128 == 0 and t_cg * d * itemsize <= 2 * TARGET]
        if cand:
            t_hw = max(cand)
    n_hw = HW // t_hw

    # --- batch tile: amortize the ~600-cycle per-grid-step overhead on small
    #     feature maps by moving several images per step.
    slab_bytes = t_cg * t_hw * itemsize
    cand = [d for d in _divisors(N) if d * slab_bytes <= TARGET]
    t_n = max(cand) if cand else 1

    block_bytes = t_n * slab_bytes
    # 1 input + 1 output, double-buffered, plus a little headroom.
    vmem_limit = int(min(64 * 1024 * 1024,
                         max(32 * 1024 * 1024, 4 * block_bytes + 2 * 1024 * 1024)))

    # Metadata-only reshape: x4[n, a, b, p] == x[n, a*cg + b, p_flat].
    x4 = x.reshape(N, g, cg, HW)

    # Output viewed as (N, cg, g*HW): out_flat[n, b, a*HW + p] = out[n, b*g + a, p],
    # so the block produced at grid point (n, a, c, h) lands at last-dim block
    # index a*n_hw + h and channel-tile index c.
    out_flat = pl.pallas_call(
        _copy_kernel,
        out_shape=jax.ShapeDtypeStruct((N, cg, g * HW), x.dtype),
        grid=(N // t_n, g, cg // t_cg, n_hw),
        in_specs=[
            pl.BlockSpec((t_n, pl.Squeezed(), t_cg, t_hw),
                         lambda n, a, c, h: (n, a, c, h)),
        ],
        out_specs=pl.BlockSpec((t_n, t_cg, t_hw),
                               lambda n, a, c, h: (n, c, a * n_hw + h)),
        compiler_params=pltpu.CompilerParams(
            dimension_semantics=("parallel", "parallel", "parallel", "parallel"),
            vmem_limit_bytes=vmem_limit,
        ),
    )(x4)

    # Metadata-only reshape back to NCHW (channel index = b*g + a).
    return out_flat.reshape(N, C, H, W)


# ---------------------------------------------------------------------------
# Fallback: per-channel gather via scalar-prefetched indices (any H, W).
# Whole batch per channel, spatial dims flattened for long contiguous runs.
# ---------------------------------------------------------------------------
def _gather_kernel(ind_ref, x_ref, o_ref):
    del ind_ref  # consumed by the index_map
    o_ref[...] = x_ref[...]


def _shuffle_gather(x: jax.Array, shuffle_ind: jax.Array) -> jax.Array:
    N, C, H, W = x.shape
    HW = H * W
    itemsize = jnp.dtype(x.dtype).itemsize
    x3 = x.reshape(N, C, HW)  # metadata-only

    block_bytes = N * HW * itemsize
    vmem_limit = int(min(64 * 1024 * 1024,
                         max(32 * 1024 * 1024, 4 * block_bytes + 2 * 1024 * 1024)))

    grid_spec = pltpu.PrefetchScalarGridSpec(
        num_scalar_prefetch=1,
        grid=(C,),
        in_specs=[
            pl.BlockSpec((N, 1, HW), lambda c, ind: (0, ind[c], 0)),
        ],
        out_specs=pl.BlockSpec((N, 1, HW), lambda c, ind: (0, c, 0)),
    )
    out3 = pl.pallas_call(
        _gather_kernel,
        out_shape=jax.ShapeDtypeStruct((N, C, HW), x.dtype),
        grid_spec=grid_spec,
        compiler_params=pltpu.CompilerParams(
            dimension_semantics=("parallel",),
            vmem_limit_bytes=vmem_limit,
        ),
    )(shuffle_ind, x3)
    return out3.reshape(N, C, H, W)


# ---------------------------------------------------------------------------
# Public wrapper: matches shuffle_layer.forward (NCHW, out = x[:, shuffle_ind]).
# ---------------------------------------------------------------------------
def shuffle_layer_pallas(x: jax.Array, groups: int = 4) -> jax.Array:
    N, C, H, W = x.shape
    assert C % groups == 0, "input_channel must be divisible by groups"
    if groups == 1:
        return x  # identity permutation
    if (H * W) % 128 == 0:
        return _shuffle_fast(x, groups)
    # TODO(synk): spatial sizes not a multiple of 128 use the per-channel
    # gather kernel (correct for any H, W, but its stores are lane-masked).
    shuffle_ind = jnp.asarray(make_shuffle_ind(C, groups), dtype=jnp.int32)
    return _shuffle_gather(x, shuffle_ind)


if __name__ == "__main__":
    groups = 4

    # Fast path: H*W = 256 (multiple of 128) -> lane-dense transpose-by-BlockSpec.
    N, C, H, W = 2, 8, 16, 16
    x = jax.random.normal(jax.random.PRNGKey(0), (N, C, H, W), dtype=jnp.float32)
    out = jax.block_until_ready(shuffle_layer_pallas(x, groups))
    ref = np.asarray(x)[:, make_shuffle_ind(C, groups)]
    np.testing.assert_allclose(np.asarray(out), ref, rtol=0, atol=0)

    # Fallback path: H*W = 49 (not a multiple of 128) -> scalar-prefetch gather.
    N2, C2, H2, W2 = 2, 8, 7, 7
    x2 = jax.random.normal(jax.random.PRNGKey(1), (N2, C2, H2, W2), jnp.float32)
    out2 = jax.block_until_ready(shuffle_layer_pallas(x2, groups))
    ref2 = np.asarray(x2)[:, make_shuffle_ind(C2, groups)]
    np.testing.assert_allclose(np.asarray(out2), ref2, rtol=0, atol=0)

    print("KERNEL_OK")
</pallas_src>

<mosaic_0001>
module attributes {stable_mosaic.version = 11 : i64} {
  func.func @_copy_kernel(%arg0: i32, %arg1: i32, %arg2: i32, %arg3: i32, %arg4: memref<2x1x2x256xf32, #tpu.memory_space<vmem>>, %arg5: memref<2x2x256xf32, #tpu.memory_space<vmem>>) attributes {dimension_semantics = [#tpu.dimension_semantics<parallel>, #tpu.dimension_semantics<parallel>, #tpu.dimension_semantics<parallel>, #tpu.dimension_semantics<parallel>], iteration_bounds = array<i64: 1, 4, 1, 1>, scalar_prefetch = 0 : i64, scratch_operands = 0 : i64, tpu.core_type = #tpu.core_type<tc>, window_params = [{transform_indices = @transform_0, window_bounds = array<i64: 2, 1, 2, 256>}, {transform_indices = @transform_1, window_bounds = array<i64: 2, 2, 256>}]} {
    %c0 = arith.constant 0 : index
    %c0_0 = arith.constant 0 : index
    %c0_1 = arith.constant 0 : index
    %c0_2 = arith.constant 0 : index
    %0 = vector.load %arg4[%c0, %c0_0, %c0_1, %c0_2] : memref<2x1x2x256xf32, #tpu.memory_space<vmem>>, vector<2x1x2x256xf32>
    %1 = vector.shape_cast %0 : vector<2x1x2x256xf32> to vector<2x2x256xf32>
    %c0_3 = arith.constant 0 : index
    %c0_4 = arith.constant 0 : index
    %c0_5 = arith.constant 0 : index
    %2 = vector.load %arg5[%c0_3, %c0_4, %c0_5] : memref<2x2x256xf32, #tpu.memory_space<vmem>>, vector<2x2x256xf32>
    tpu.vector_store %arg5[%c0_3, %c0_4, %c0_5], %1 {strides = array<i32>} : memref<2x2x256xf32, #tpu.memory_space<vmem>>, vector<2x2x256xf32>,
    return
  }
  func.func @transform_0(%arg0: i32, %arg1: i32, %arg2: i32, %arg3: i32) -> (i32, i32, i32, i32) {
    %c0_i32 = arith.constant 0 : i32
    return %arg0, %arg1, %arg2, %arg3 : i32, i32, i32, i32
  }
  func.func @transform_1(%arg0: i32, %arg1: i32, %arg2: i32, %arg3: i32) -> (i32, i32, i32) {
    %c1_i32 = arith.constant 1 : i32
    %0 = arith.muli %arg1, %c1_i32 : i32
    %1 = arith.addi %0, %arg3 : i32
    %c0_i32 = arith.constant 0 : i32
    return %arg0, %arg2, %1 : i32, i32, i32
  }
}

</mosaic_0001>

<llo_original>
// kernel: tpu_custom_call.1
$region0: #{tpu_custom_call.1}
  #allocation0 [shape = 'u32[]', space=smem, size = 0x4, offset = 0x4, fixed_abs, tag = 'smem constant byte address 0x4 - core index']
  #allocation1 [shape = 'u32[144,128]{1,0:T(1,128)}', space=vmem, size = 0x12000, scoped, tag = 'internal scratch']
  %s0 = inlined_call_operand.hbm [shape: f32[2,4,2,256], index: 0, kind: input, shape index: {}]
  %s1 = inlined_call_operand.hbm [shape: f32[2,2,1024], index: 1, kind: output, shape index: {}]
  %s2 = sld [smem:[#allocation0]]
  $region41: #{tpu_custom_call.1} parent=0
    _
  %s4 = ssub.s32 1, %s2
  %s5 = scalar_select 0, %s4, %s2
  $region1: #{tpu_custom_call.1} parent=0
    #allocation2 [shape = 'u8[8192]{0}', space=vmem, size = 0x2000, scoped, tag = 'input window, operand 0']
    #allocation3 [shape = 's32[2]{0}', space=sflag, size = 0x8, scoped, tag = 'scoped memory for tpu_custom_call.1']
    #allocation4 [shape = 's32[2]{0}', space=sflag, size = 0x8, scoped, tag = 'scoped memory for tpu_custom_call.1']
    #allocation5 [shape = 'u8[8192]{0}', space=vmem, size = 0x2000, scoped, tag = 'output window, operand 0']
    %6 = vsyncpa [#allocation3], 0
    %s7 = scalar_lea.sflag [#allocation3], 1
    %8 = vsyncpa %s7, 0
    %9 = vsyncpa [#allocation4], 0
    %s10 = scalar_lea.sflag [#allocation4], 1
    %11 = vsyncpa %s10, 0
    loop: start=0, step=1, limit=6
    $region2: #{tpu_custom_call.1} parent=1 // loop_pre_header
      _
    $region3: #{tpu_custom_call.1} parent=1 // loop_header
      %s13 = sphi 0, %s17
      %p14 = scmp.ge.s32.totalorder %s13, 6
      %s20 = sphi 0, %s46
      %s21 = sphi 0, %s42
      %s22 = sphi 0, %s38
      %s23 = sphi 0, %s34
      %s24 = sphi 0, %s20
      %s25 = sphi 0, %s21
      %s26 = sphi 0, %s22
      %s27 = sphi 0, %s23
      %s28 = sphi 0, %s24
      %s29 = sphi 0, %s25
      %s30 = sphi 0, %s26
      %s31 = sphi 0, %s27
      %s55 = sphi 0, %s57
      %s58 = sphi 0, %s55
      %s59 = sphi 0, %s58
      %s75 = sphi 0, %s59
      %s87 = sphi 0, %s89
      %s90 = sphi 0, %s87
      %s91 = sphi 0, %s90
      %s107 = sphi 0, %s91
    $region4: #{tpu_custom_call.1} parent=1 // loop_header_branch
      %16 = sbr.rel (%p14) target = $region8
    $region5: #{tpu_custom_call.1} parent=1 // loop_body
      %s18 = ssub.s32 %s13, 1
      %s19 = ssub.s32 %s13, 2
      %s32 = sadd.s32 1, %s23
      %p33 = scmp.ge.s32.totalorder %s32, 1
      %s34 = scalar_select %p33, 0, %s32
      %s35 = sadd.s32 1, %s22
      %s36 = scalar_select %p33, %s35, %s22
      %p37 = scmp.ge.s32.totalorder %s36, 1
      %s38 = scalar_select %p37, 0, %s36
      %s39 = sadd.s32 1, %s21
      %s40 = scalar_select %p37, %s39, %s21
      %p41 = scmp.ge.s32.totalorder %s40, 4
      %s42 = scalar_select %p41, 0, %s40
      %s43 = sadd.s32 1, %s20
      %s44 = scalar_select %p41, %s43, %s20
      %p45 = scmp.ge.s32.totalorder %s44, 1
      %s46 = scalar_select %p45, 0, %s44
      %s47 = ssub.s32 %s20, %s46
      %s48 = ssub.s32 %s21, %s42
      %s49 = sor.u32 %s47, %s48
      %s50 = ssub.s32 %s22, %s38
      %s51 = sor.u32 %s49, %s50
      %s52 = ssub.s32 %s23, %s34
      %s53 = sor.u32 %s51, %s52
      %p54 = scmp.eq.s32.totalorder %s53, 0
      %s56 = sadd.s32 %s55, 1
      %s57 = scalar_select %p54, %s55, %s56
      %p60 = pneg %p54
      %p61 = scmp.eq.s32.totalorder %s13, 3
      %p62 = por %p60, %p61
      %p63 = scmp.ne.s32.totalorder %s55, %s58
      %p64 = scmp.eq.s32.totalorder %s13, 0
      %p65 = por %p63, %p64
      %p66 = scmp.ne.s32.totalorder %s55, %s58
      %p67 = scmp.eq.s32.totalorder %s18, 3
      %p68 = por %p66, %p67
      %p69 = scmp.ne.s32.totalorder %s58, %s59
      %p70 = scmp.eq.s32.totalorder %s18, 0
      %p71 = por %p69, %p70
      %p72 = scmp.ne.s32.totalorder %s58, %s59
      %p73 = scmp.eq.s32.totalorder %s19, 3
      %p74 = por %p72, %p73
      %p76 = scmp.ne.s32.totalorder %s59, %s75
      %p77 = scmp.eq.s32.totalorder %s19, 0
      %p78 = por %p76, %p77
      %s79 = sadd.s32 %s21, %s23
      %s80 = sadd.s32 %s42, %s34
      %s81 = ssub.s32 %s20, %s46
      %s82 = ssub.s32 %s22, %s38
      %s83 = sor.u32 %s81, %s82
      %s84 = ssub.s32 %s79, %s80
      %s85 = sor.u32 %s83, %s84
      %p86 = scmp.eq.s32.totalorder %s85, 0
      %s88 = sadd.s32 %s87, 1
      %s89 = scalar_select %p86, %s87, %s88
      %p92 = pneg %p86
      %p93 = scmp.eq.s32.totalorder %s13, 3
      %p94 = por %p92, %p93
      %p95 = scmp.ne.s32.totalorder %s87, %s90
      %p96 = scmp.eq.s32.totalorder %s13, 0
      %p97 = por %p95, %p96
      %p98 = scmp.ne.s32.totalorder %s87, %s90
      %p99 = scmp.eq.s32.totalorder %s18, 3
      %p100 = por %p98, %p99
      %p101 = scmp.ne.s32.totalorder %s90, %s91
      %p102 = scmp.eq.s32.totalorder %s18, 0
      %p103 = por %p101, %p102
      %p104 = scmp.ne.s32.totalorder %s90, %s91
      %p105 = scmp.eq.s32.totalorder %s19, 3
      %p106 = por %p104, %p105
      %p108 = scmp.ne.s32.totalorder %s91, %s107
      %p109 = scmp.eq.s32.totalorder %s19, 0
      %p110 = por %p108, %p109
      %p111 = scmp.le.s32.totalorder 1, %s13
      %p112 = scmp.lt.s32.totalorder %s13, 5
      %p113 = pnand %p111, %p112
      %p114 = pneg %p113
      // Predicated region
      $region9: #{tpu_custom_call.1} parent=5 // pred_check
        _
      $region10: #{tpu_custom_call.1} parent=5 // pred_check_branch
        %116 = sbr.rel (%p113) target = $region12
      $region11: #{tpu_custom_call.1} parent=5 // pred_region
        %s117 = ssub.s32 %s13, 1
      $region12: #{tpu_custom_call.1} parent=5 // pred_fallthru
        _
      %p118 = scmp.lt.s32.totalorder %s13, 4
      // Predicated region
      $region13: #{tpu_custom_call.1} parent=5 // pred_check
        %p119 = pneg %p118
      $region14: #{tpu_custom_call.1} parent=5 // pred_check_branch
        %121 = sbr.rel (%p119) target = $region16
      $region15: #{tpu_custom_call.1} parent=5 // pred_region
        // Predicated region
        $region17: #{tpu_custom_call.1} parent=15 // pred_check
          %p122 = pneg %p65
        $region18: #{tpu_custom_call.1} parent=15 // pred_check_branch
          %124 = sbr.rel (%p122) target = $region20
        $region19: #{tpu_custom_call.1} parent=15 // pred_region
          %s125 = sand.u32 %s55, 1
          %s126 = scalar_lea.sflag [#allocation3], %s125
          %s127 = sand.u32 %s55, 1
          %s128 = smul.addr %s127, 8
          %s129 = scalar_lea.vmem [#allocation2], %s128
          %s130 = smul.u32 2, %s20
          %s131 = smul.u32 2, %s23
          %s133 = ssub.s32 128, 128
          %134 = vsyncadd %s126, %s133
          %s135 = smul.addr %s22, 2
          %s136 = sadd.s32 %s131, %s135
          %s137 = smul.addr %s21, 2
          %s138 = sadd.s32 %s136, %s137
          %s139 = smul.addr %s130, 8
          %s140 = sadd.s32 %s138, %s139
          %s141 = smul.addr %s140, 32
          %s142 = scalar_lea.hbm %s0, %s141
          %s143 = sshll.u32 %s129, 4
          %s144 = int_to_ptr.vmem [resolvable:$true] %s143
          %149 = dma.hbm_to_vmem [thread:$0]  %s142, 128, %s144, %s126, 256, 64, 4
        $region20: #{tpu_custom_call.1} parent=15 // pred_fallthru
          _
      $region16: #{tpu_custom_call.1} parent=5 // pred_fallthru
        _
      %p150 = scmp.le.s32.totalorder 1, %s13
      %p151 = scmp.lt.s32.totalorder %s13, 5
      %p152 = pnand %p150, %p151
      %p153 = pneg %p152
      // Predicated region
      $region21: #{tpu_custom_call.1} parent=5 // pred_check
        _
      $region22: #{tpu_custom_call.1} parent=5 // pred_check_branch
        %155 = sbr.rel (%p152) target = $region24
      $region23: #{tpu_custom_call.1} parent=5 // pred_region
        %s156 = ssub.s32 %s13, 1
        %s157 = sand.u32 %s58, 1
        %s158 = scalar_lea.sflag [#allocation3], %s157
        %s159 = sand.u32 %s58, 1
        %s160 = smul.addr %s159, 8
        %s161 = scalar_lea.vmem [#allocation2], %s160
        // Predicated region
        $region25: #{tpu_custom_call.1} parent=23 // pred_check
          %p162 = pneg %p71
        $region26: #{tpu_custom_call.1} parent=23 // pred_check_branch
          %164 = sbr.rel (%p162) target = $region28
        $region27: #{tpu_custom_call.1} parent=23 // pred_region
          %165 = dma.done %s158, 128
        $region28: #{tpu_custom_call.1} parent=23 // pred_fallthru
          _
        %s166 = sand.u32 %s58, 1
        %s167 = scalar_lea.sflag [#allocation3], %s166
        %s168 = sand.u32 %s58, 1
        %s169 = smul.addr %s168, 8
        %s170 = scalar_lea.vmem [#allocation2], %s169
        %p171 = pneg %p71
        %p172 = pneg %p68
        %p173 = pneg %p103
        %p174 = pneg %p100
        %s175 = sand.u32 %s90, 1
        %s176 = scalar_lea.sflag [#allocation4], %s175
        %s177 = sand.u32 %s90, 1
        %s178 = smul.addr %s177, 8
        %s179 = scalar_lea.vmem [#allocation5], %s178
        %s180 = smul.u32 2, %s24
        %s181 = smul.u32 2, %s27
        %s182 = sadd.s32 %s25, %s27
        %s183 = smul.u32 2, %s24
        %s184 = smul.u32 2, %s182
        %v185 = vld [vmem:[%s161] sm:$0xf]
        %v186 = vld [vmem:[%s161 + $0x4] sm:$0xf]
        %187 = vst [vmem:[%s179] sm:$0xf] %v185
        %188 = vst [vmem:[%s179 + $0x4] sm:$0xf] %v186
        %s189 = sand.u32 %s90, 1
        %s190 = scalar_lea.sflag [#allocation4], %s189
        %s191 = sand.u32 %s90, 1
        %s192 = smul.addr %s191, 8
        %s193 = scalar_lea.vmem [#allocation5], %s192
        // Predicated region
        $region29: #{tpu_custom_call.1} parent=23 // pred_check
          %p194 = pneg %p100
        $region30: #{tpu_custom_call.1} parent=23 // pred_check_branch
          %196 = sbr.rel (%p194) target = $region32
        $region31: #{tpu_custom_call.1} parent=23 // pred_region
          %s197 = sadd.s32 %s25, %s27
          %s198 = smul.u32 2, %s24
          %s199 = smul.u32 2, %s197
          %s201 = ssub.s32 128, 128
          %202 = vsyncadd %s190, %s201
          %s203 = smul.addr %s26, 8
          %s204 = sadd.s32 %s199, %s203
          %s205 = smul.addr %s198, 8
          %s206 = sadd.s32 %s204, %s205
          %s207 = smul.addr %s206, 32
          %s208 = scalar_lea.hbm %s1, %s207
          %s209 = sshll.u32 %s193, 4
          %s210 = int_to_ptr.vmem [resolvable:$true] %s209
          %215 = dma.vmem_to_hbm [thread:$0]  %s210, 128, %s208, %s190, 64, 256, 4
        $region32: #{tpu_custom_call.1} parent=23 // pred_fallthru
          _
      $region24: #{tpu_custom_call.1} parent=5 // pred_fallthru
        _
      %p216 = scmp.le.s32.totalorder 2, %s13
      // Predicated region
      $region33: #{tpu_custom_call.1} parent=5 // pred_check
        %p217 = pneg %p216
      $region34: #{tpu_custom_call.1} parent=5 // pred_check_branch
        %219 = sbr.rel (%p217) target = $region36
      $region35: #{tpu_custom_call.1} parent=5 // pred_region
        %s220 = ssub.s32 %s13, 2
        // Predicated region
        $region37: #{tpu_custom_call.1} parent=35 // pred_check
          %p221 = pneg %p106
        $region38: #{tpu_custom_call.1} parent=35 // pred_check_branch
          %223 = sbr.rel (%p221) target = $region40
        $region39: #{tpu_custom_call.1} parent=35 // pred_region
          %s224 = sand.u32 %s91, 1
          %s225 = scalar_lea.sflag [#allocation4], %s224
          %s226 = sand.u32 %s91, 1
          %s227 = smul.addr %s226, 8
          %s228 = scalar_lea.vmem [#allocation5], %s227
          %229 = dma.done %s225, 128
        $region40: #{tpu_custom_call.1} parent=35 // pred_fallthru
          _
      $region36: #{tpu_custom_call.1} parent=5 // pred_fallthru
        _
    $region6: #{tpu_custom_call.1} parent=1 // loop_footer
      %s17 = sadd.s32 1, %s13
    $region7: #{tpu_custom_call.1} parent=1 // loop_footer_branch
      %12 = sbr.rel target = $region3
    $region8: #{tpu_custom_call.1} parent=1 // loop_exit
      _
    %230 = vsyncpa [#allocation3], 1
    %s231 = scalar_lea.sflag [#allocation3], 1
    %232 = vsyncpa %s231, 1
    %233 = vsyncpa [#allocation4], 1
    %s234 = scalar_lea.sflag [#allocation4], 1
    %235 = vsyncpa %s234, 1

</llo_original>
